<compile_context>
chip_gen: v7x
topology: tpu7x:2x2x1
jax: 0.10.0
libtpu: 0.0.40
codegen_flags: <defaults>
</compile_context>

<pallas_src>
import math

import jax
import jax.numpy as jnp
from jax.experimental import pallas as pl
from jax.experimental.pallas import tpu as pltpu


def _round_up(x, m):
    return (x + m - 1) // m * m


# ----------------------------- Pallas kernel -----------------------------

def deit_embeddings_kernel(xpad_ref, w_ref, base_ref, o_ref):
    """One grid step: project a batch-block of im2col patches and add the
    fused (pos + [cls; dist; conv-bias]) additive term.

    xpad_ref : (Nb, S, K)  im2col patches; rows 0/1 (and pad rows) are zero.
    w_ref    : (K, H)      conv weight in matmul form (resident across grid).
    base_ref : (S, H)      pos + [cls; dist; bias], f32 (resident).
    o_ref    : (Nb, S, H)  output embeddings block.
    """
    proj = jax.lax.dot_general(
        xpad_ref[...], w_ref[...],
        dimension_numbers=(((2,), (0,)), ((), ())),
        preferred_element_type=jnp.float32)              # (Nb, S, H), f32 acc
    # base broadcasts (S, H) -> (Nb, S, H); rows 0/1 carry the CLS /
    # distillation tokens (their GEMM rows are exact zeros), rows >= 2 carry
    # the conv bias; all rows already include the position embedding.
    o_ref[...] = (proj + base_ref[...]).astype(o_ref.dtype)
    # TODO(synk): hidden_dropout is a no-op in eval mode (p -> identity).


# ------------------------------- wrapper ---------------------------------

def _im2col(pixel_values, patch_size):
    """(B, C, H, W) -> (B, num_patches, C*p*p); pure layout, no compute."""
    B, C, H, W = pixel_values.shape
    p = patch_size
    Hp, Wp = H // p, W // p
    x = pixel_values.reshape(B, C, Hp, p, Wp, p)
    x = x.transpose(0, 2, 4, 1, 3, 5)            # (B, Hp, Wp, C, p, p)
    return x.reshape(B, Hp * Wp, C * p * p)


def deit_embeddings(pixel_values, w_conv, b_conv, cls_token, dist_token,
                    pos_emb, patch_size, *, block_b=8,
                    compute_dtype=jnp.float32):
    """Pallas implementation of DeiTEmbeddings.forward (eval, default args).

    TODO(synk): bool_masked_pos mask-token mixing and interpolate_pos_encoding
    (bicubic resize) are non-default forward paths and are not implemented.
    """
    B, C, _, _ = pixel_values.shape
    hidden = w_conv.shape[0]
    K = C * patch_size * patch_size

    # -------- layout plumbing in the wrapper (no compute) --------
    patches = _im2col(pixel_values, patch_size)          # (B, P, K)
    P = patches.shape[1]
    S = P + 2

    # Sublane-align the token axis so in-kernel stores are dense slabs.
    sub = 16 if compute_dtype == jnp.bfloat16 else 8
    S_pad = _round_up(S, sub)

    # Two leading zero rows per image = CLS / distillation slots (GEMM yields
    # exact zeros there); trailing zero rows = sublane padding.
    xpad = jnp.pad(patches, ((0, 0), (2, S_pad - S), (0, 0)))  # (B, S_pad, K)

    # Batch tiling: pad B up to a multiple of the batch block.
    block_b = max(1, min(block_b, B))
    B_pad = _round_up(B, block_b)
    if B_pad != B:
        xpad = jnp.pad(xpad, ((0, B_pad - B), (0, 0), (0, 0)))
    xpad = xpad.astype(compute_dtype)

    w_mat = w_conv.reshape(hidden, K).T.astype(compute_dtype)   # (K, H)

    # Fused additive term (S_pad, H) built ONCE in the wrapper:
    #   row 0 -> cls + pos[0], row 1 -> dist + pos[1], rows>=2 -> bias + pos,
    #   padded rows -> 0.
    pos2 = pos_emb.reshape(S, hidden).astype(jnp.float32)
    base = jnp.concatenate(
        [pos2[0:1] + cls_token.reshape(1, hidden).astype(jnp.float32),
         pos2[1:2] + dist_token.reshape(1, hidden).astype(jnp.float32),
         pos2[2:] + b_conv.reshape(1, hidden).astype(jnp.float32)], axis=0)
    base = jnp.pad(base, ((0, S_pad - S), (0, 0)))              # (S_pad, H)

    grid = (B_pad // block_b,)
    out_dtype = pixel_values.dtype

    in_item = jnp.dtype(compute_dtype).itemsize
    out_item = jnp.dtype(out_dtype).itemsize
    flops = 2 * B_pad * S_pad * K * hidden
    bytes_accessed = (B_pad * S_pad * K * in_item            # xpad read
                      + K * hidden * in_item                  # weight read
                      + S_pad * hidden * 4                    # base read
                      + B_pad * S_pad * hidden * out_item)    # output write

    out = pl.pallas_call(
        deit_embeddings_kernel,
        out_shape=jax.ShapeDtypeStruct((B_pad, S_pad, hidden), out_dtype),
        grid_spec=pltpu.PrefetchScalarGridSpec(
            num_scalar_prefetch=0,
            grid=grid,
            in_specs=[
                # batch-tiled, auto-pipelined
                pl.BlockSpec((block_b, S_pad, K), lambda i: (i, 0, 0)),
                # resident across the whole grid (constant block index)
                pl.BlockSpec((K, hidden), lambda i: (0, 0)),
                pl.BlockSpec((S_pad, hidden), lambda i: (0, 0)),
            ],
            out_specs=pl.BlockSpec((block_b, S_pad, hidden),
                                   lambda i: (i, 0, 0)),
        ),
        compiler_params=pltpu.CompilerParams(
            dimension_semantics=("parallel",),       # 2 TCs on v7x
            vmem_limit_bytes=32 * 1024 * 1024,       # safe on v5e/v6e/v7x
        ),
        cost_estimate=pl.CostEstimate(
            flops=flops, transcendentals=0, bytes_accessed=bytes_accessed),
    )(xpad, w_mat, base)

    # Drop batch / sequence padding.
    return out[:B, :S, :]


# ------------------------------ reference --------------------------------

def reference_deit_embeddings(pixel_values, w_conv, b_conv, cls_token,
                              dist_token, pos_emb, patch_size):
    """Pure-JAX reference replicating the PyTorch forward semantics."""
    B = pixel_values.shape[0]
    conv = jax.lax.conv_general_dilated(
        pixel_values, w_conv,
        window_strides=(patch_size, patch_size),
        padding="VALID",
        dimension_numbers=("NCHW", "OIHW", "NCHW"),
        precision=jax.lax.Precision.HIGHEST,
    )                                                       # (B, H, Hp, Wp)
    conv = conv + b_conv.reshape(1, -1, 1, 1)
    Bc, Hd, Hp, Wp = conv.shape
    patch_emb = conv.reshape(B, Hd, Hp * Wp).transpose(0, 2, 1)  # (B, P, H)
    cls = jnp.broadcast_to(cls_token, (B, 1, Hd))
    dist = jnp.broadcast_to(dist_token, (B, 1, Hd))
    emb = jnp.concatenate([cls, dist, patch_emb], axis=1)
    emb = emb + pos_emb                                     # dropout: eval no-op
    return emb


# --------------------------------- main -----------------------------------

if __name__ == "__main__":
    key = jax.random.PRNGKey(0)
    k_px, k_w, k_b, k_cls, k_dist, k_pos = jax.random.split(key, 6)

    B, C, IMG, P_SZ, HID = 2, 3, 16, 4, 32
    NUM_PATCHES = (IMG // P_SZ) ** 2          # 16
    SEQ = NUM_PATCHES + 2                     # 18

    pixel_values = jax.random.normal(k_px, (B, C, IMG, IMG), dtype=jnp.float32)

    fan_in = C * P_SZ * P_SZ
    bound = 1.0 / math.sqrt(fan_in)
    w_conv = jax.random.uniform(k_w, (HID, C, P_SZ, P_SZ), jnp.float32,
                                -bound, bound)
    b_conv = jax.random.uniform(k_b, (HID,), jnp.float32, -bound, bound)
    cls_token = 0.02 * jax.random.normal(k_cls, (1, 1, HID), jnp.float32)
    dist_token = 0.02 * jax.random.normal(k_dist, (1, 1, HID), jnp.float32)
    pos_emb = 0.02 * jax.random.normal(k_pos, (1, SEQ, HID), jnp.float32)

    out = deit_embeddings(pixel_values, w_conv, b_conv, cls_token, dist_token,
                          pos_emb, P_SZ)
    out = jax.block_until_ready(out)

    ref = reference_deit_embeddings(pixel_values, w_conv, b_conv, cls_token,
                                    dist_token, pos_emb, P_SZ)

    assert out.shape == (B, SEQ, HID)
    max_err = jnp.max(jnp.abs(out - ref))
    assert jnp.allclose(out, ref, atol=1e-4, rtol=1e-4), (
        f"max abs err = {max_err}"
    )
    print("KERNEL_OK")
</pallas_src>

<mosaic_0001>
module attributes {stable_mosaic.version = 11 : i64} {
  func.func @deit_embeddings_kernel(%arg0: i32, %arg1: memref<2x24x48xf32, #tpu.memory_space<vmem>>, %arg2: memref<48x32xf32, #tpu.memory_space<vmem>>, %arg3: memref<24x32xf32, #tpu.memory_space<vmem>>, %arg4: memref<2x24x32xf32, #tpu.memory_space<vmem>>) attributes {dimension_semantics = [#tpu.dimension_semantics<parallel>], iteration_bounds = array<i64: 1>, scalar_prefetch = 0 : i64, scratch_operands = 0 : i64, tpu.core_type = #tpu.core_type<tc>, window_params = [{transform_indices = @transform_0, window_bounds = array<i64: 2, 24, 48>}, {pipeline_mode = #tpu.pipeline_mode<synchronous>, transform_indices = @transform_1, window_bounds = array<i64: 48, 32>}, {pipeline_mode = #tpu.pipeline_mode<synchronous>, transform_indices = @transform_2, window_bounds = array<i64: 24, 32>}, {transform_indices = @transform_3, window_bounds = array<i64: 2, 24, 32>}]} {
    %c0 = arith.constant 0 : index
    %c0_0 = arith.constant 0 : index
    %c0_1 = arith.constant 0 : index
    %0 = vector.load %arg1[%c0, %c0_0, %c0_1] : memref<2x24x48xf32, #tpu.memory_space<vmem>>, vector<2x24x48xf32>
    %c0_2 = arith.constant 0 : index
    %c0_3 = arith.constant 0 : index
    %1 = vector.load %arg2[%c0_2, %c0_3] : memref<48x32xf32, #tpu.memory_space<vmem>>, vector<48x32xf32>
    %cst = arith.constant dense<0.000000e+00> : vector<2x24x32xf32>
    %2 = tpu.matmul %0, %1, %cst {dimension_numbers = #tpu.dot_dimension_numbers<[2], [0], [0, 1], [1], [0, 0, 0, 1, 1, 1], [], []>} : vector<2x24x48xf32>, vector<48x32xf32>, vector<2x24x32xf32> -> vector<2x24x32xf32>
    %c0_4 = arith.constant 0 : index
    %c0_5 = arith.constant 0 : index
    %3 = vector.load %arg3[%c0_4, %c0_5] : memref<24x32xf32, #tpu.memory_space<vmem>>, vector<24x32xf32>
    %4 = vector.shape_cast %3 : vector<24x32xf32> to vector<1x24x32xf32>
    %5 = vector.broadcast %4 : vector<1x24x32xf32> to vector<2x24x32xf32>
    %6 = arith.addf %2, %5 : vector<2x24x32xf32>
    %c0_6 = arith.constant 0 : index
    %c0_7 = arith.constant 0 : index
    %c0_8 = arith.constant 0 : index
    %7 = vector.load %arg4[%c0_6, %c0_7, %c0_8] : memref<2x24x32xf32, #tpu.memory_space<vmem>>, vector<2x24x32xf32>
    tpu.vector_store %arg4[%c0_6, %c0_7, %c0_8], %6 {strides = array<i32>} : memref<2x24x32xf32, #tpu.memory_space<vmem>>, vector<2x24x32xf32>,
    return
  }
  func.func @transform_0(%arg0: i32) -> (i32, i32, i32) {
    %c0_i32 = arith.constant 0 : i32
    %c0_i32_0 = arith.constant 0 : i32
    %c0_i32_1 = arith.constant 0 : i32
    return %arg0, %c0_i32, %c0_i32_0 : i32, i32, i32
  }
  func.func @transform_1(%arg0: i32) -> (i32, i32) {
    %c0_i32 = arith.constant 0 : i32
    %c0_i32_0 = arith.constant 0 : i32
    %c0_i32_1 = arith.constant 0 : i32
    return %c0_i32, %c0_i32_0 : i32, i32
  }
  func.func @transform_2(%arg0: i32) -> (i32, i32) {
    %c0_i32 = arith.constant 0 : i32
    %c0_i32_0 = arith.constant 0 : i32
    %c0_i32_1 = arith.constant 0 : i32
    return %c0_i32, %c0_i32_0 : i32, i32
  }
  func.func @transform_3(%arg0: i32) -> (i32, i32, i32) {
    %c0_i32 = arith.constant 0 : i32
    %c0_i32_0 = arith.constant 0 : i32
    %c0_i32_1 = arith.constant 0 : i32
    return %arg0, %c0_i32, %c0_i32_0 : i32, i32, i32
  }
}

</mosaic_0001>

<llo_original>
// kernel: tpu_custom_call.1
$region0: #{tpu_custom_call.1}
  #allocation0 [shape = 'u32[]', space=smem, size = 0x4, offset = 0x4, fixed_abs, tag = 'smem constant byte address 0x4 - core index']
  #allocation1 [shape = 'u32[144,128]{1,0:T(1,128)}', space=vmem, size = 0x12000, scoped, tag = 'internal scratch']
  %s0 = inlined_call_operand.vmem [shape: f32[2,24,48], index: 0, kind: input, shape index: {}]
  %s1 = inlined_call_operand.vmem [shape: f32[48,32], index: 1, kind: input, shape index: {}]
  %s2 = inlined_call_operand.vmem [shape: f32[24,32], index: 2, kind: input, shape index: {}]
  %s3 = inlined_call_operand.hbm [shape: f32[2,24,32], index: 3, kind: output, shape index: {}]
  %s4 = sld [smem:[#allocation0]]
  $region22: #{tpu_custom_call.1} parent=0
    _
  %s6 = ssub.s32 1, %s4
  %s7 = scalar_select 0, %s6, %s4
  $region1: #{tpu_custom_call.1} parent=0
    #allocation2 [shape = 'u8[24576]{0}', space=vmem, size = 0x6000, scoped, tag = 'output window, operand 0, single buffered']
    #allocation3 [shape = 's32[1]{0}', space=sflag, size = 0x4, scoped, tag = 'scoped memory for tpu_custom_call.1']
    %8 = vsyncpa [#allocation3], 0
    // Predicated region
    $region2: #{tpu_custom_call.1} parent=1 // pred_check
      _
    $region3: #{tpu_custom_call.1} parent=1 // pred_check_branch
      %10 = sbr.rel (0) target = $region5
    $region4: #{tpu_custom_call.1} parent=1 // pred_region
      _
    $region5: #{tpu_custom_call.1} parent=1 // pred_fallthru
      _
    // Predicated region
    $region6: #{tpu_custom_call.1} parent=1 // pred_check
      _
    $region7: #{tpu_custom_call.1} parent=1 // pred_check_branch
      %12 = sbr.rel (0) target = $region9
    $region8: #{tpu_custom_call.1} parent=1 // pred_region
      _
    $region9: #{tpu_custom_call.1} parent=1 // pred_fallthru
      _
    // Predicated region
    $region10: #{tpu_custom_call.1} parent=1 // pred_check
      _
    $region11: #{tpu_custom_call.1} parent=1 // pred_check_branch
      %14 = sbr.rel (0) target = $region13
    $region12: #{tpu_custom_call.1} parent=1 // pred_region
      _
    $region13: #{tpu_custom_call.1} parent=1 // pred_fallthru
      _
    %v15 = vld [vmem:[%s0] sm:$0xff]
    %v16 = vld [vmem:[%s0 + $0x8] sm:$0xff]
    %v17 = vld [vmem:[%s0 + $0x10] sm:$0xff]
    %v18 = vld [vmem:[%s0 + $0x18] sm:$0xff]
    %v19 = vld [vmem:[%s0 + $0x20] sm:$0xff]
    %v20 = vld [vmem:[%s0 + $0x28] sm:$0xff]
    %v21 = vld [vmem:[%s1] sm:$0xff]
    %v22 = vld [vmem:[%s1 + $0x8] sm:$0xff]
    %v23 = vld [vmem:[%s1 + $0x10] sm:$0xff]
    %v24 = vld [vmem:[%s1 + $0x18] sm:$0xff]
    %v25 = vld [vmem:[%s1 + $0x20] sm:$0xff]
    %v26 = vld [vmem:[%s1 + $0x28] sm:$0xff]
    %v27 = vld [vmem:[%s2] sm:$0xff]
    %v28 = vld [vmem:[%s2 + $0x8] sm:$0xff]
    %v29 = vld [vmem:[%s2 + $0x10] sm:$0xff]
    %vm30 = vcmask 392192
    %v32 = vsel %vm30, %v15, 0
    %v35 = vsel %vm30, %v16, 0
    %v38 = vsel %vm30, %v17, 0
    %v41 = vsel %vm30, %v18, 0
    %v44 = vsel %vm30, %v19, 0
    %v47 = vsel %vm30, %v20, 0
    %49 = vmatprep.subr.mxu0 0.0
    %50 = vmatpush1.msra.mxu0 %v21
    %51 = vmatprep.subr.mxu0 0.0
    %52 = vmatpush1.msra.mxu0 %v22
    %53 = vmatprep.subr.mxu0 0.0
    %54 = vmatpush1.msra.mxu0 %v23
    %55 = vmatprep.subr.mxu0 0.0
    %56 = vmatpush1.msra.mxu0 %v24
    %57 = vmatprep.subr.mxu0 0.0
    %58 = vmatpush1.msra.mxu0 %v25
    %59 = vmatprep.subr.mxu0 0.0
    %60 = vmatpush1.msra.mxu0 %v26
    %61 = vmatprep.subr.mxu0 0.0
    %62 = vmatpush1.msra.mxu0 0.0
    %63 = vmatprep.subr.mxu0 0.0
    %64 = vmatpush1.msra.mxu0 0.0
    %65 = vmatprep.subr.mxu0 0.0
    %66 = vmatpush1.msra.mxu0 0.0
    %67 = vmatprep.subr.mxu0 0.0
    %68 = vmatpush1.msra.mxu0 0.0
    %69 = vmatprep.subr.mxu0 0.0
    %70 = vmatpush1.msra.mxu0 0.0
    %71 = vmatprep.subr.mxu0 0.0
    %72 = vmatpush1.msra.mxu0 0.0
    %73 = vmatprep.subr.mxu0 0.0
    %74 = vmatpush1.msra.mxu0 0.0
    %75 = vmatprep.subr.mxu0 0.0
    %76 = vmatpush1.msra.mxu0 0.0
    %77 = vmatprep.subr.mxu0 0.0
    %78 = vmatpush1.msra.mxu0 0.0
    %79 = vmatprep.subr.mxu0 0.0
    %80 = vmatpush1.msra.mxu0 0.0
    %81 = vmatprep.subr.mxu0 0.0
    %82 = vmatpush1.msra.mxu0 0.0
    %83 = vmatprep.subr.mxu0 0.0
    %84 = vmatpush1.msra.mxu0 0.0
    %85 = vmatprep.subr.mxu0 0.0
    %86 = vmatpush1.msra.mxu0 0.0
    %87 = vmatprep.subr.mxu0 0.0
    %88 = vmatpush1.msra.mxu0 0.0
    %89 = vmatprep.subr.mxu0 0.0
    %90 = vmatpush1.msra.mxu0 0.0
    %91 = vmatprep.subr.mxu0 0.0
    %92 = vmatpush1.msra.mxu0 0.0
    %93 = vmatprep.subr.mxu0 0.0
    %94 = vmatpush1.msra.mxu0 0.0
    %95 = vmatprep.subr.mxu0 0.0
    %96 = vmatpush1.msra.mxu0 0.0
    %97 = vmatprep.subr.mxu0 0.0
    %98 = vmatpush1.msra.mxu0 0.0
    %99 = vmatprep.subr.mxu0 0.0
    %100 = vmatpush1.msra.mxu0 0.0
    %101 = vmatprep.subr.mxu0 0.0
    %102 = vmatpush1.msra.mxu0 0.0
    %103 = vmatprep.subr.mxu0 0.0
    %104 = vmatpush1.msra.mxu0 0.0
    %105 = vmatprep.subr.mxu0 0.0
    %106 = vmatpush1.msra.mxu0 0.0
    %107 = vmatprep.subr.mxu0 0.0
    %108 = vmatpush1.msra.mxu0 0.0
    %109 = vmatprep.subr.mxu0 0.0
    %110 = vmatpush1.msra.mxu0 0.0
    %111 = vmatprep.subr.mxu0 0.0
    %112 = vmatpush1.msra.mxu0 0.0
    %113 = vmatprep.mubr.f32.mxu0 0.0
    %114 = vmatmul.mubr.f32.gmra.mrb[0].mxu0 %v32
    %v115 = vpop.f32.mrb[0].mxu0
    %v116 = vadd.f32 %v27, %v115
    %v117 = vpop.f32.mrb[0].mxu0
    %118 = vmatprep.mubr.f32.mxu0 0.0
    %119 = vmatmul.mubr.f32.gmra.mrb[0].mxu0 %v35
    %v120 = vpop.f32.mrb[0].mxu0
    %v121 = vadd.f32 %v28, %v120
    %v122 = vpop.f32.mrb[0].mxu0
    %123 = vmatprep.mubr.f32.mxu0 0.0
    %124 = vmatmul.mubr.f32.gmra.mrb[0].mxu0 %v38
    %v125 = vpop.f32.mrb[0].mxu0
    %v126 = vadd.f32 %v29, %v125
    %v127 = vpop.f32.mrb[0].mxu0
    %128 = vmatprep.mubr.f32.mxu0 0.0
    %129 = vmatmul.mubr.f32.gmra.mrb[0].mxu0 %v41
    %v130 = vpop.f32.mrb[0].mxu0
    %v131 = vadd.f32 %v27, %v130
    %v132 = vpop.f32.mrb[0].mxu0
    %133 = vmatprep.mubr.f32.mxu0 0.0
    %134 = vmatmul.mubr.f32.gmra.mrb[0].mxu0 %v44
    %v135 = vpop.f32.mrb[0].mxu0
    %v136 = vadd.f32 %v28, %v135
    %v137 = vpop.f32.mrb[0].mxu0
    %138 = vmatprep.mubr.f32.mxu0 0.0
    %139 = vmatmul.mubr.f32.gmra.mrb[0].mxu0 %v47
    %v140 = vpop.f32.mrb[0].mxu0
    %v141 = vadd.f32 %v29, %v140
    %v142 = vpop.f32.mrb[0].mxu0
    %143 = vdwg.mxu0
    %vm144 = vcmask 261120
    %145 = vst.msk [vmem:[#allocation2] sm:$0xff] %vm144, %v116
    %146 = vst.msk [vmem:[#allocation2 + $0x8] sm:$0xff] %vm144, %v121
    %147 = vst.msk [vmem:[#allocation2 + $0x10] sm:$0xff] %vm144, %v126
    %148 = vst.msk [vmem:[#allocation2 + $0x18] sm:$0xff] %vm144, %v131
    %149 = vst.msk [vmem:[#allocation2 + $0x20] sm:$0xff] %vm144, %v136
    %150 = vst.msk [vmem:[#allocation2 + $0x28] sm:$0xff] %vm144, %v141
    // Predicated region
    $region14: #{tpu_custom_call.1} parent=1 // pred_check
      _
    $region15: #{tpu_custom_call.1} parent=1 // pred_check_branch
      %152 = sbr.rel (0) target = $region17
    $region16: #{tpu_custom_call.1} parent=1 // pred_region
      %s154 = ssub.s32 768, 768
      %155 = vsyncadd [#allocation3], %s154
      %s156 = sshll.u32 [#allocation2], 4
      %s157 = int_to_ptr.vmem [resolvable:$true] %s156
      %162 = dma.vmem_to_hbm [thread:$0]  %s157, 768, %s3, [#allocation3], 128, 128, 8
    $region17: #{tpu_custom_call.1} parent=1 // pred_fallthru
      _
    // Predicated region
    $region18: #{tpu_custom_call.1} parent=1 // pred_check
      _
    $region19: #{tpu_custom_call.1} parent=1 // pred_check_branch
      %164 = sbr.rel (0) target = $region21
    $region20: #{tpu_custom_call.1} parent=1 // pred_region
      %165 = dma.done [#allocation3], 768
    $region21: #{tpu_custom_call.1} parent=1 // pred_fallthru
      _
    %166 = vsyncpa [#allocation3], 1

</llo_original>
